<compile_context>
chip_gen: v5e
topology: v5e:2x2
jax: 0.10.0
libtpu: 0.0.40
codegen_flags: <defaults>
</compile_context>

<pallas_src>
import math

import jax
import jax.numpy as jnp
from jax.experimental import pallas as pl
from jax.experimental.pallas import tpu as pltpu

INPUT_DIM = 100
HIDDEN = 64
NUM_CLASSES = 2


def _round_up(n, m):
    return ((n + m - 1) // m) * m


def _mlp_kernel(x_ref, w1_ref, b1_ref, w2_ref, b2_ref, o_ref):
    # fc1 + ReLU: bf16 inputs, f32 accumulation on the MXU.
    h = jnp.dot(x_ref[...], w1_ref[...], preferred_element_type=jnp.float32)
    h = jnp.maximum(h + b1_ref[...], 0.0)          # (TB, 64) + (1, 64) broadcast
    # fc2 (tiny: N=2) — MXU has massive slack in this mem-bound regime.
    y = jnp.dot(h, w2_ref[...], preferred_element_type=jnp.float32)
    o_ref[...] = (y + b2_ref[...]).astype(o_ref.dtype)   # (TB, 2) + (1, 2)


def mimic_model_forward(x, w1, b1, w2, b2, *, max_tile=2048):
    """x: (B, INPUT_DIM) f32.  Returns logits (B, NUM_CLASSES) f32."""
    B = x.shape[0]

    # Stream the big operands in bf16 (halves HBM bytes); f32 accumulation in-kernel.
    xb = x.astype(jnp.bfloat16)
    w1b = w1.astype(jnp.bfloat16)

    # Batch tile: multiple of 8 (sublane), capped at max_tile rows.
    TB = min(max_tile, _round_up(B, 8))
    Bp = _round_up(B, TB)
    if Bp != B:
        xb = jnp.pad(xb, ((0, Bp - B), (0, 0)))
    grid = (Bp // TB,)

    # Advisory cost estimate so XLA can schedule/overlap this custom call sensibly.
    flops = 2 * B * (INPUT_DIM * HIDDEN + HIDDEN * NUM_CLASSES)
    bytes_accessed = (
        Bp * INPUT_DIM * 2                       # x stream (bf16)
        + Bp * NUM_CLASSES * 4                   # logits writeback (f32)
        + INPUT_DIM * HIDDEN * 2                 # w1 (bf16)
        + (HIDDEN * NUM_CLASSES + HIDDEN + NUM_CLASSES) * 4
    )
    cost = pl.CostEstimate(flops=flops, transcendentals=0,
                           bytes_accessed=bytes_accessed)

    out = pl.pallas_call(
        _mlp_kernel,
        out_shape=jax.ShapeDtypeStruct((Bp, NUM_CLASSES), jnp.float32),
        grid_spec=pltpu.PrefetchScalarGridSpec(
            num_scalar_prefetch=0,
            grid=grid,
            in_specs=[
                pl.BlockSpec((TB, INPUT_DIM), lambda i: (i, 0)),   # x tile
                pl.BlockSpec(w1b.shape, lambda i: (0, 0)),         # w1 resident
                pl.BlockSpec(b1.shape, lambda i: (0, 0)),          # b1 resident
                pl.BlockSpec(w2.shape, lambda i: (0, 0)),          # w2 resident
                pl.BlockSpec(b2.shape, lambda i: (0, 0)),          # b2 resident
            ],
            out_specs=pl.BlockSpec((TB, NUM_CLASSES), lambda i: (i, 0)),
        ),
        compiler_params=pltpu.CompilerParams(
            dimension_semantics=("parallel",)),     # use 2nd TC on v7x
        cost_estimate=cost,
    )(xb, w1b, b1, w2, b2)

    return out[:B] if Bp != B else out


def init_params(key):
    """Deterministic init mimicking PyTorch nn.Linear default U[-1/sqrt(fan_in), +]."""
    k1, k2, k3, k4 = jax.random.split(key, 4)
    bound1 = 1.0 / math.sqrt(INPUT_DIM)
    bound2 = 1.0 / math.sqrt(HIDDEN)
    # stored as (in, out) so kernel does x @ W
    w1 = jax.random.uniform(k1, (INPUT_DIM, HIDDEN), jnp.float32, -bound1, bound1)
    b1 = jax.random.uniform(k2, (1, HIDDEN), jnp.float32, -bound1, bound1)
    w2 = jax.random.uniform(k3, (HIDDEN, NUM_CLASSES), jnp.float32, -bound2, bound2)
    b2 = jax.random.uniform(k4, (1, NUM_CLASSES), jnp.float32, -bound2, bound2)
    return w1, b1, w2, b2


def reference_forward(x, w1, b1, w2, b2):
    # Pure f32 reference (PyTorch semantics); kernel streams x/w1 in bf16, so
    # comparison uses a relaxed tolerance (expected precision loss, not a bug).
    h = jnp.maximum(x @ w1 + b1, 0.0)
    return h @ w2 + b2


if __name__ == "__main__":
    key = jax.random.PRNGKey(0)
    kx, kp = jax.random.split(key)
    batch = 8
    x = jax.random.normal(kx, (batch, INPUT_DIM), jnp.float32)
    w1, b1, w2, b2 = init_params(kp)

    out = mimic_model_forward(x, w1, b1, w2, b2)
    out = jax.block_until_ready(out)

    ref = reference_forward(x, w1, b1, w2, b2)
    assert out.shape == (batch, NUM_CLASSES)
    assert out.dtype == jnp.float32
    # bf16 input streaming -> relaxed tolerance vs f32 reference.
    assert jnp.allclose(out, ref, atol=3e-2, rtol=3e-2), "mismatch vs reference"
    print("KERNEL_OK")
</pallas_src>

<mosaic_0001>
module attributes {stable_mosaic.version = 11 : i64} {
  func.func @_mlp_kernel(%arg0: i32, %arg1: memref<8x100xbf16, #tpu.memory_space<vmem>>, %arg2: memref<100x64xbf16, #tpu.memory_space<vmem>>, %arg3: memref<1x64xf32, #tpu.memory_space<vmem>>, %arg4: memref<64x2xf32, #tpu.memory_space<vmem>>, %arg5: memref<1x2xf32, #tpu.memory_space<vmem>>, %arg6: memref<8x2xf32, #tpu.memory_space<vmem>>) attributes {dimension_semantics = [#tpu.dimension_semantics<parallel>], iteration_bounds = array<i64: 1>, scalar_prefetch = 0 : i64, scratch_operands = 0 : i64, tpu.core_type = #tpu.core_type<tc>, window_params = [{transform_indices = @transform_0, window_bounds = array<i64: 8, 100>}, {pipeline_mode = #tpu.pipeline_mode<synchronous>, transform_indices = @transform_1, window_bounds = array<i64: 100, 64>}, {pipeline_mode = #tpu.pipeline_mode<synchronous>, transform_indices = @transform_2, window_bounds = array<i64: 1, 64>}, {pipeline_mode = #tpu.pipeline_mode<synchronous>, transform_indices = @transform_3, window_bounds = array<i64: 64, 2>}, {pipeline_mode = #tpu.pipeline_mode<synchronous>, transform_indices = @transform_4, window_bounds = array<i64: 1, 2>}, {transform_indices = @transform_5, window_bounds = array<i64: 8, 2>}]} {
    %c0 = arith.constant 0 : index
    %c0_0 = arith.constant 0 : index
    %0 = vector.load %arg1[%c0, %c0_0] : memref<8x100xbf16, #tpu.memory_space<vmem>>, vector<8x100xbf16>
    %c0_1 = arith.constant 0 : index
    %c0_2 = arith.constant 0 : index
    %1 = vector.load %arg2[%c0_1, %c0_2] : memref<100x64xbf16, #tpu.memory_space<vmem>>, vector<100x64xbf16>
    %cst = arith.constant dense<0.000000e+00> : vector<8x64xf32>
    %2 = tpu.matmul %0, %1, %cst {dimension_numbers = #tpu.dot_dimension_numbers<[1], [0], [0], [1], [0, 0, 1, 1], [], []>} : vector<8x100xbf16>, vector<100x64xbf16>, vector<8x64xf32> -> vector<8x64xf32>
    %c0_3 = arith.constant 0 : index
    %c0_4 = arith.constant 0 : index
    %3 = vector.load %arg3[%c0_3, %c0_4] : memref<1x64xf32, #tpu.memory_space<vmem>>, vector<1x64xf32>
    %4 = vector.broadcast %3 : vector<1x64xf32> to vector<8x64xf32>
    %5 = arith.addf %2, %4 : vector<8x64xf32>
    %cst_5 = arith.constant 0.000000e+00 : f32
    %6 = vector.broadcast %cst_5 : f32 to vector<8x64xf32>
    %7 = arith.maximumf %5, %6 : vector<8x64xf32>
    %c0_6 = arith.constant 0 : index
    %c0_7 = arith.constant 0 : index
    %8 = vector.load %arg4[%c0_6, %c0_7] : memref<64x2xf32, #tpu.memory_space<vmem>>, vector<64x2xf32>
    %cst_8 = arith.constant dense<0.000000e+00> : vector<8x2xf32>
    %9 = tpu.matmul %7, %8, %cst_8 {dimension_numbers = #tpu.dot_dimension_numbers<[1], [0], [0], [1], [0, 0, 1, 1], [], []>} : vector<8x64xf32>, vector<64x2xf32>, vector<8x2xf32> -> vector<8x2xf32>
    %c0_9 = arith.constant 0 : index
    %c0_10 = arith.constant 0 : index
    %10 = vector.load %arg5[%c0_9, %c0_10] : memref<1x2xf32, #tpu.memory_space<vmem>>, vector<1x2xf32>
    %11 = vector.broadcast %10 : vector<1x2xf32> to vector<8x2xf32>
    %12 = arith.addf %9, %11 : vector<8x2xf32>
    %c0_11 = arith.constant 0 : index
    %c0_12 = arith.constant 0 : index
    %13 = vector.load %arg6[%c0_11, %c0_12] : memref<8x2xf32, #tpu.memory_space<vmem>>, vector<8x2xf32>
    tpu.vector_store %arg6[%c0_11, %c0_12], %12 {strides = array<i32>} : memref<8x2xf32, #tpu.memory_space<vmem>>, vector<8x2xf32>,
    return
  }
  func.func @transform_0(%arg0: i32) -> (i32, i32) {
    %c0_i32 = arith.constant 0 : i32
    %c0_i32_0 = arith.constant 0 : i32
    return %arg0, %c0_i32 : i32, i32
  }
  func.func @transform_1(%arg0: i32) -> (i32, i32) {
    %c0_i32 = arith.constant 0 : i32
    %c0_i32_0 = arith.constant 0 : i32
    %c0_i32_1 = arith.constant 0 : i32
    return %c0_i32, %c0_i32_0 : i32, i32
  }
  func.func @transform_2(%arg0: i32) -> (i32, i32) {
    %c0_i32 = arith.constant 0 : i32
    %c0_i32_0 = arith.constant 0 : i32
    %c0_i32_1 = arith.constant 0 : i32
    return %c0_i32, %c0_i32_0 : i32, i32
  }
  func.func @transform_3(%arg0: i32) -> (i32, i32) {
    %c0_i32 = arith.constant 0 : i32
    %c0_i32_0 = arith.constant 0 : i32
    %c0_i32_1 = arith.constant 0 : i32
    return %c0_i32, %c0_i32_0 : i32, i32
  }
  func.func @transform_4(%arg0: i32) -> (i32, i32) {
    %c0_i32 = arith.constant 0 : i32
    %c0_i32_0 = arith.constant 0 : i32
    %c0_i32_1 = arith.constant 0 : i32
    return %c0_i32, %c0_i32_0 : i32, i32
  }
  func.func @transform_5(%arg0: i32) -> (i32, i32) {
    %c0_i32 = arith.constant 0 : i32
    %c0_i32_0 = arith.constant 0 : i32
    return %arg0, %c0_i32 : i32, i32
  }
}

</mosaic_0001>

<llo_original>
// kernel: tpu_custom_call.1
$region0: #{tpu_custom_call.1}
  #allocation0 [shape = 'u32[]', space=smem, size = 0x4, offset = 0x4, fixed_abs, tag = 'smem constant byte address 0x4 - core index']
  #allocation1 [shape = 'u32[72,128]{1,0:T(1,128)}', space=vmem, size = 0x9000, scoped, tag = 'internal scratch']
  %s0 = inlined_call_operand.vmem [shape: bf16[8,100], index: 0, kind: input, shape index: {}]
  %s1 = inlined_call_operand.vmem [shape: bf16[100,64], index: 1, kind: input, shape index: {}]
  %s2 = inlined_call_operand.vmem [shape: f32[1,64], index: 2, kind: input, shape index: {}]
  %s3 = inlined_call_operand.vmem [shape: f32[64,2], index: 3, kind: input, shape index: {}]
  %s4 = inlined_call_operand.vmem [shape: f32[1,2], index: 4, kind: input, shape index: {}]
  %s5 = inlined_call_operand.vmem [shape: f32[8,2], index: 5, kind: output, shape index: {}]
  %s6 = sld [smem:[#allocation0]]
  $region30: #{tpu_custom_call.1} parent=0
    _
  %s8 = ssub.s32 1, %s6
  %s9 = scalar_select 0, %s8, %s6
  // Predicated region
  $region2: #{tpu_custom_call.1} parent=0 // pred_check
    _
  $region3: #{tpu_custom_call.1} parent=0 // pred_check_branch
    %11 = sbr.rel (0) target = $region5
  $region4: #{tpu_custom_call.1} parent=0 // pred_region
    _
  $region5: #{tpu_custom_call.1} parent=0 // pred_fallthru
    _
  // Predicated region
  $region6: #{tpu_custom_call.1} parent=0 // pred_check
    _
  $region7: #{tpu_custom_call.1} parent=0 // pred_check_branch
    %13 = sbr.rel (0) target = $region9
  $region8: #{tpu_custom_call.1} parent=0 // pred_region
    _
  $region9: #{tpu_custom_call.1} parent=0 // pred_fallthru
    _
  // Predicated region
  $region10: #{tpu_custom_call.1} parent=0 // pred_check
    _
  $region11: #{tpu_custom_call.1} parent=0 // pred_check_branch
    %15 = sbr.rel (0) target = $region13
  $region12: #{tpu_custom_call.1} parent=0 // pred_region
    _
  $region13: #{tpu_custom_call.1} parent=0 // pred_fallthru
    _
  // Predicated region
  $region14: #{tpu_custom_call.1} parent=0 // pred_check
    _
  $region15: #{tpu_custom_call.1} parent=0 // pred_check_branch
    %17 = sbr.rel (0) target = $region17
  $region16: #{tpu_custom_call.1} parent=0 // pred_region
    _
  $region17: #{tpu_custom_call.1} parent=0 // pred_fallthru
    _
  // Predicated region
  $region18: #{tpu_custom_call.1} parent=0 // pred_check
    _
  $region19: #{tpu_custom_call.1} parent=0 // pred_check_branch
    %19 = sbr.rel (0) target = $region21
  $region20: #{tpu_custom_call.1} parent=0 // pred_region
    _
  $region21: #{tpu_custom_call.1} parent=0 // pred_fallthru
    _
  %v21 = vld [vmem:[%s0] sm:$0xf]
  %v22 = vld [vmem:[%s1] sm:$0xf]
  %v23 = vld [vmem:[%s1 + $0x4] sm:$0xf]
  %v24 = vld [vmem:[%s1 + $0x8] sm:$0xf]
  %v25 = vld [vmem:[%s1 + $0xc] sm:$0xf]
  %v26 = vld [vmem:[%s1 + $0x10] sm:$0xf]
  %v27 = vld [vmem:[%s1 + $0x14] sm:$0xf]
  %v28 = vld [vmem:[%s1 + $0x18] sm:$0xf]
  %v29 = vld [vmem:[%s1 + $0x1c] sm:$0xf]
  %v30 = vld [vmem:[%s1 + $0x20] sm:$0xf]
  %v31 = vld [vmem:[%s1 + $0x24] sm:$0xf]
  %v32 = vld [vmem:[%s1 + $0x28] sm:$0xf]
  %v33 = vld [vmem:[%s1 + $0x2c] sm:$0xf]
  %v34 = vld [vmem:[%s1 + $0x30] sm:$0x3]
  %v35 = vld [vmem:[%s2] sm:$0x1]
  %v37 = vperm.slane %v35, 0
  %v52 = vunpack.c.l.b16 %v22
  %v53 = vunpack.c.l.b16 %v23
  %v54 = vunpack.c.l.b16 %v24
  %v55 = vunpack.c.l.b16 %v25
  %v56 = vunpack.c.l.b16 %v26
  %v57 = vunpack.c.l.b16 %v27
  %v58 = vunpack.c.l.b16 %v28
  %v59 = vunpack.c.l.b16 %v29
  %v60 = vunpack.c.l.b16 %v30
  %v61 = vunpack.c.l.b16 %v31
  %v62 = vunpack.c.l.b16 %v32
  %v63 = vunpack.c.l.b16 %v33
  %v64 = vunpack.c.l.b16 %v34
  %v65 = vpack.c.b16 %v53, %v52
  %v66 = vpack.c.b16 %v55, %v54
  %v67 = vpack.c.b16 %v57, %v56
  %v68 = vpack.c.b16 %v59, %v58
  %v69 = vpack.c.b16 %v61, %v60
  %v70 = vpack.c.b16 %v63, %v62
  %v71 = vpack.c.b16 %v64, %v64
  %vm78 = vcmask 818176
  %v80 = vsel %vm78, %v21, 0
  %vm82 = vcmask 1041408
  %v84 = vsel %vm82, %v71, 0
  %86 = vmatpush.bf16.msra.mxu0 0
  %87 = vmatpush.bf16.msra.mxu0 %v84
  %88 = vmatpush.bf16.msra.mxu0 %v70
  %89 = vmatpush.bf16.msra.mxu0 %v69
  %90 = vmatpush.bf16.msra.mxu0 %v68
  %91 = vmatpush.bf16.msra.mxu0 %v67
  %92 = vmatpush.bf16.msra.mxu0 %v66
  %93 = vmatpush.bf16.msra.mxu0 %v65
  %94 = vmatmul.bf16.gmra.mxu0 %v80
  %v95 = vpop.f32.mrf.mxu0
  %v96 = vadd.f32 %v37, %v95
  %v97 = vpop.f32.mrf.mxu0
  %98 = vdwg.mxu0
  %v99 = vmax.f32 %v96, 0.0
  %v100 = vld [vmem:[%s3] sm:$0xff]
  %v101 = vld [vmem:[%s3 + $0x8] sm:$0xff]
  %v102 = vld [vmem:[%s3 + $0x10] sm:$0xff]
  %v103 = vld [vmem:[%s3 + $0x18] sm:$0xff]
  %v104 = vld [vmem:[%s3 + $0x20] sm:$0xff]
  %v105 = vld [vmem:[%s3 + $0x28] sm:$0xff]
  %v106 = vld [vmem:[%s3 + $0x30] sm:$0xff]
  %v107 = vld [vmem:[%s3 + $0x38] sm:$0xff]
  %v108 = vld [vmem:[%s4] sm:$0x1]
  %v110 = vperm.slane %v108, 0
  %vm112 = vcmask 523264
  %v114 = vsel %vm112, %v99, 0
  %116 = vmatpush.msra.mxu0 0.0
  %117 = vmatpush.msra.mxu0 0.0
  %118 = vmatpush.msra.mxu0 0.0
  %119 = vmatpush.msra.mxu0 0.0
  %120 = vmatpush.msra.mxu0 0.0
  %121 = vmatpush.msra.mxu0 0.0
  %122 = vmatpush.msra.mxu0 0.0
  %123 = vmatpush.msra.mxu0 0.0
  %124 = vmatpush.msra.mxu0 %v107
  %125 = vmatpush.msra.mxu0 %v106
  %126 = vmatpush.msra.mxu0 %v105
  %127 = vmatpush.msra.mxu0 %v104
  %128 = vmatpush.msra.mxu0 %v103
  %129 = vmatpush.msra.mxu0 %v102
  %130 = vmatpush.msra.mxu0 %v101
  %131 = vmatpush.msra.mxu0 %v100
  %132 = vmatmul.f32.gmra.mxu0 %v114
  %v133 = vpop.f32.mrf.mxu0
  %v134 = vadd.f32 %v110, %v133
  %135 = vdwg.mxu0
  %vm136 = vcmask 15360
  %137 = vst.msk [vmem:[%s5] sm:$0xff] %vm136, %v134
  // Predicated region
  $region22: #{tpu_custom_call.1} parent=0 // pred_check
    _
  $region23: #{tpu_custom_call.1} parent=0 // pred_check_branch
    %139 = sbr.rel (0) target = $region25
  $region24: #{tpu_custom_call.1} parent=0 // pred_region
    _
  $region25: #{tpu_custom_call.1} parent=0 // pred_fallthru
    _
  // Predicated region
  $region26: #{tpu_custom_call.1} parent=0 // pred_check
    _
  $region27: #{tpu_custom_call.1} parent=0 // pred_check_branch
    %141 = sbr.rel (0) target = $region29
  $region28: #{tpu_custom_call.1} parent=0 // pred_region
    _
  $region29: #{tpu_custom_call.1} parent=0 // pred_fallthru
    _

</llo_original>
